<compile_context>
chip_gen: v5e
topology: v5e:2x2
jax: 0.10.0
libtpu: 0.0.40
codegen_flags: <defaults>
</compile_context>

<pallas_src>
import jax
import jax.numpy as jnp
from jax.experimental import pallas as pl
from jax.experimental.pallas import tpu as pltpu

# --- module hyperparameters (synthetic, small) ------------------------------
INPUT_SIZE = 22
HIDDEN_SIZE = INPUT_SIZE + 10      # 32, as in the PyTorch module
OUTPUT_SIZE = 8
BATCH = 8


def _affine_kernel(x_ref, wc_ref, bc_ref, o_ref):
    """Fused fc2(fc1(x)) collapsed to one affine: y = x @ Wc + bc."""
    o_ref[...] = (
        jnp.dot(x_ref[...], wc_ref[...], preferred_element_type=jnp.float32)
        + bc_ref[...]
    )


def pack_params(w1, b1, w2, b2):
    """Fold the activation-free 2-layer MLP into a single affine.

    PyTorch convention: w1 is [hidden, in], w2 is [out, hidden], biases [fan_out].
    Returns Wc = W1^T @ W2^T  (INPUT_SIZE, OUTPUT_SIZE) and
            bc = b1 @ W2^T + b2  reshaped to (1, OUTPUT_SIZE).
    """
    w1t = jnp.transpose(w1).astype(jnp.float32)              # (22, 32)
    w2t = jnp.transpose(w2).astype(jnp.float32)              # (32, 8)
    wc = jnp.dot(w1t, w2t)                                   # (22, 8)
    bc = (jnp.dot(b1.astype(jnp.float32), w2t)
          + b2.astype(jnp.float32)).reshape(1, OUTPUT_SIZE)  # (1, 8)
    return wc, bc


def nn_2layers_uniform(x, wc, bc, *, block_b=4096):
    """x: [B, INPUT_SIZE] f32. Returns [B, OUTPUT_SIZE] f32.

    block_b: batch-tile rows for the gridded (large-batch) path.  4096 is safe
    on all generations (v5e 16 MiB default scoped VMEM); 8192-16384 is fine on
    v6e/v7x for a bit more pipeline-overhead amortization.
    """
    B, F = x.shape
    assert F == INPUT_SIZE
    x = x.astype(jnp.float32)

    if B <= block_b:
        # Single invocation, no grid, no per-step pipeline overhead.
        return pl.pallas_call(
            _affine_kernel,
            out_shape=jax.ShapeDtypeStruct((B, OUTPUT_SIZE), jnp.float32),
        )(x, wc, bc)

    # Large-batch path: big batch tiles, weights resident via constant
    # index_maps, parallel grid so both TensorCores (v7x) take a share.
    assert block_b % 8 == 0
    nb = pl.cdiv(B, block_b)
    b_pad = nb * block_b
    if b_pad != B:
        x = jnp.pad(x, ((0, b_pad - B), (0, 0)))   # padded rows -> dropped below

    out = pl.pallas_call(
        _affine_kernel,
        out_shape=jax.ShapeDtypeStruct((b_pad, OUTPUT_SIZE), jnp.float32),
        grid_spec=pltpu.PrefetchScalarGridSpec(
            num_scalar_prefetch=0,
            grid=(nb,),
            in_specs=[
                pl.BlockSpec((block_b, INPUT_SIZE), lambda i: (i, 0)),    # x tile
                pl.BlockSpec((INPUT_SIZE, OUTPUT_SIZE), lambda i: (0, 0)),  # Wc (resident)
                pl.BlockSpec((1, OUTPUT_SIZE), lambda i: (0, 0)),           # bc (resident)
            ],
            out_specs=pl.BlockSpec((block_b, OUTPUT_SIZE), lambda i: (i, 0)),
        ),
        compiler_params=pltpu.CompilerParams(
            dimension_semantics=("parallel",),
        ),
    )(x, wc, bc)

    return out[:B] if b_pad != B else out


def init_params(key):
    """Deterministic init matching the PyTorch module's __init__ semantics:
    weights ~ U[0,1) (init.uniform_), biases use nn.Linear's default
    U(-1/sqrt(fan_in), 1/sqrt(fan_in))."""
    k1, k2, k3, k4 = jax.random.split(key, 4)
    # PyTorch stores Linear weight as [out, in].
    w1 = jax.random.uniform(k1, (HIDDEN_SIZE, INPUT_SIZE), jnp.float32, 0.0, 1.0)
    w2 = jax.random.uniform(k2, (OUTPUT_SIZE, HIDDEN_SIZE), jnp.float32, 0.0, 1.0)
    bound1 = 1.0 / jnp.sqrt(jnp.float32(INPUT_SIZE))
    bound2 = 1.0 / jnp.sqrt(jnp.float32(HIDDEN_SIZE))
    b1 = jax.random.uniform(k3, (HIDDEN_SIZE,), jnp.float32, -bound1, bound1)
    b2 = jax.random.uniform(k4, (OUTPUT_SIZE,), jnp.float32, -bound2, bound2)
    return w1, b1, w2, b2


if __name__ == "__main__":
    key = jax.random.PRNGKey(0)
    kx, kp, kx2 = jax.random.split(key, 3)
    w1, b1, w2, b2 = init_params(kp)
    wc, bc = pack_params(w1, b1, w2, b2)

    # Primary (small) check: batch 8, single-invocation (grid-less) path.
    x = jax.random.normal(kx, (BATCH, INPUT_SIZE), jnp.float32)
    out = jax.block_until_ready(nn_2layers_uniform(x, wc, bc))
    ref = (x @ w1.T + b1) @ w2.T + b2
    assert out.shape == (BATCH, OUTPUT_SIZE)
    assert jnp.allclose(out, ref, atol=1e-3, rtol=1e-4), \
        float(jnp.max(jnp.abs(out - ref)))

    # Secondary check: exercise the tiled grid path + ragged-batch padding
    # (B=200 with block_b=64 -> grid of 4, last tile padded).
    x2 = jax.random.normal(kx2, (200, INPUT_SIZE), jnp.float32)
    out2 = jax.block_until_ready(nn_2layers_uniform(x2, wc, bc, block_b=64))
    ref2 = (x2 @ w1.T + b1) @ w2.T + b2
    assert out2.shape == (200, OUTPUT_SIZE)
    assert jnp.allclose(out2, ref2, atol=1e-3, rtol=1e-4), \
        float(jnp.max(jnp.abs(out2 - ref2)))

    print("KERNEL_OK")
</pallas_src>

<mosaic_0001>
module attributes {stable_mosaic.version = 11 : i64} {
  func.func @_affine_kernel(%arg0: memref<8x22xf32, #tpu.memory_space<vmem>>, %arg1: memref<22x8xf32, #tpu.memory_space<vmem>>, %arg2: memref<1x8xf32, #tpu.memory_space<vmem>>, %arg3: memref<8x8xf32, #tpu.memory_space<vmem>>) attributes {dimension_semantics = [], scalar_prefetch = 0 : i64, scratch_operands = 0 : i64, tpu.core_type = #tpu.core_type<tc>} {
    %c0 = arith.constant 0 : index
    %c0_0 = arith.constant 0 : index
    %0 = vector.load %arg0[%c0, %c0_0] : memref<8x22xf32, #tpu.memory_space<vmem>>, vector<8x22xf32>
    %c0_1 = arith.constant 0 : index
    %c0_2 = arith.constant 0 : index
    %1 = vector.load %arg1[%c0_1, %c0_2] : memref<22x8xf32, #tpu.memory_space<vmem>>, vector<22x8xf32>
    %cst = arith.constant dense<0.000000e+00> : vector<8x8xf32>
    %2 = tpu.matmul %0, %1, %cst {dimension_numbers = #tpu.dot_dimension_numbers<[1], [0], [0], [1], [0, 0, 1, 1], [], []>} : vector<8x22xf32>, vector<22x8xf32>, vector<8x8xf32> -> vector<8x8xf32>
    %c0_3 = arith.constant 0 : index
    %c0_4 = arith.constant 0 : index
    %3 = vector.load %arg2[%c0_3, %c0_4] : memref<1x8xf32, #tpu.memory_space<vmem>>, vector<1x8xf32>
    %4 = vector.broadcast %3 : vector<1x8xf32> to vector<8x8xf32>
    %5 = arith.addf %2, %4 : vector<8x8xf32>
    %c0_5 = arith.constant 0 : index
    %c0_6 = arith.constant 0 : index
    %6 = vector.load %arg3[%c0_5, %c0_6] : memref<8x8xf32, #tpu.memory_space<vmem>>, vector<8x8xf32>
    tpu.vector_store %arg3[%c0_5, %c0_6], %5 {strides = array<i32>} : memref<8x8xf32, #tpu.memory_space<vmem>>, vector<8x8xf32>,
    return
  }
}

</mosaic_0001>

<llo_original>
// kernel: tpu_custom_call.1
$region0: #{tpu_custom_call.1}
  #allocation0 [shape = 'u32[]', space=smem, size = 0x4, offset = 0x4, fixed_abs, tag = 'smem constant byte address 0x4 - core index']
  #allocation1 [shape = 'u32[72,128]{1,0:T(1,128)}', space=vmem, size = 0x9000, scoped, tag = 'internal scratch']
  %s0 = inlined_call_operand.vmem [shape: f32[8,22], index: 0, kind: input, shape index: {}]
  %s1 = inlined_call_operand.vmem [shape: f32[22,8], index: 1, kind: input, shape index: {}]
  %s2 = inlined_call_operand.vmem [shape: f32[1,8], index: 2, kind: input, shape index: {}]
  %s3 = inlined_call_operand.hbm [shape: f32[8,8], index: 3, kind: output, shape index: {}]
  %s4 = sld [smem:[#allocation0]]
  $region22: #{tpu_custom_call.1} parent=0
    _
  %s6 = ssub.s32 1, %s4
  %s7 = scalar_select 0, %s6, %s4
  $region1: #{tpu_custom_call.1} parent=0
    #allocation2 [shape = 'u8[4096]{0}', space=vmem, size = 0x1000, scoped, tag = 'output window, operand 0, single buffered']
    #allocation3 [shape = 's32[1]{0}', space=sflag, size = 0x4, scoped, tag = 'scoped memory for tpu_custom_call.1']
    %8 = vsyncpa [#allocation3], 0
    // Predicated region
    $region2: #{tpu_custom_call.1} parent=1 // pred_check
      _
    $region3: #{tpu_custom_call.1} parent=1 // pred_check_branch
      %10 = sbr.rel (0) target = $region5
    $region4: #{tpu_custom_call.1} parent=1 // pred_region
      _
    $region5: #{tpu_custom_call.1} parent=1 // pred_fallthru
      _
    // Predicated region
    $region6: #{tpu_custom_call.1} parent=1 // pred_check
      _
    $region7: #{tpu_custom_call.1} parent=1 // pred_check_branch
      %12 = sbr.rel (0) target = $region9
    $region8: #{tpu_custom_call.1} parent=1 // pred_region
      _
    $region9: #{tpu_custom_call.1} parent=1 // pred_fallthru
      _
    // Predicated region
    $region10: #{tpu_custom_call.1} parent=1 // pred_check
      _
    $region11: #{tpu_custom_call.1} parent=1 // pred_check_branch
      %14 = sbr.rel (0) target = $region13
    $region12: #{tpu_custom_call.1} parent=1 // pred_region
      _
    $region13: #{tpu_custom_call.1} parent=1 // pred_fallthru
      _
    %v15 = vld [vmem:[%s0] sm:$0xff]
    %v16 = vld [vmem:[%s1] sm:$0xff]
    %v17 = vld [vmem:[%s1 + $0x8] sm:$0xff]
    %v18 = vld [vmem:[%s1 + $0x10] sm:$0x3f]
    %v19 = vld [vmem:[%s2] sm:$0x1]
    %v21 = vperm.slane %v19, 0
    %vm23 = vcmask 179200
    %v25 = vsel %vm23, %v15, 0
    %vm27 = vcmask 1045504
    %v29 = vsel %vm27, %v18, 0
    %31 = vmatpush.msra.mxu0 0.0
    %32 = vmatpush.msra.mxu0 0.0
    %33 = vmatpush.msra.mxu0 0.0
    %34 = vmatpush.msra.mxu0 0.0
    %35 = vmatpush.msra.mxu0 0.0
    %36 = vmatpush.msra.mxu0 0.0
    %37 = vmatpush.msra.mxu0 0.0
    %38 = vmatpush.msra.mxu0 0.0
    %39 = vmatpush.msra.mxu0 0.0
    %40 = vmatpush.msra.mxu0 0.0
    %41 = vmatpush.msra.mxu0 0.0
    %42 = vmatpush.msra.mxu0 0.0
    %43 = vmatpush.msra.mxu0 0.0
    %44 = vmatpush.msra.mxu0 %v29
    %45 = vmatpush.msra.mxu0 %v17
    %46 = vmatpush.msra.mxu0 %v16
    %47 = vmatmul.f32.gmra.mxu0 %v25
    %v48 = vpop.f32.mrf.mxu0
    %v49 = vadd.f32 %v21, %v48
    %50 = vdwg.mxu0
    %vm51 = vcmask 64512
    %52 = vst.msk [vmem:[#allocation2] sm:$0xff] %vm51, %v49
    // Predicated region
    $region14: #{tpu_custom_call.1} parent=1 // pred_check
      _
    $region15: #{tpu_custom_call.1} parent=1 // pred_check_branch
      %54 = sbr.rel (0) target = $region17
    $region16: #{tpu_custom_call.1} parent=1 // pred_region
      %56 = vsyncadd [#allocation3], 0
      %s58 = sshll.u32 [#allocation2], 4
      %s59 = int_to_ptr.vmem [resolvable:$true] %s58
      %s60 = sshll.u32 %s3, 4
      %s61 = int_to_ptr.hbm [resolvable:$true] %s60
      %63 = dma.vmem_to_hbm [thread:$0]  %s59, 128, %s61, [#allocation3]
    $region17: #{tpu_custom_call.1} parent=1 // pred_fallthru
      _
    // Predicated region
    $region18: #{tpu_custom_call.1} parent=1 // pred_check
      _
    $region19: #{tpu_custom_call.1} parent=1 // pred_check_branch
      %65 = sbr.rel (0) target = $region21
    $region20: #{tpu_custom_call.1} parent=1 // pred_region
      %67 = dma.done [#allocation3], 128
    $region21: #{tpu_custom_call.1} parent=1 // pred_fallthru
      _
    %68 = vsyncpa [#allocation3], 1

</llo_original>
